<compile_context>
chip_gen: v6e
topology: v6e:2x2x1
jax: 0.10.0
libtpu: 0.0.40
codegen_flags: <defaults>
</compile_context>

<pallas_src>
import functools
import math

import jax
import jax.numpy as jnp
from jax.experimental import pallas as pl
from jax.experimental.pallas import tpu as pltpu

_INV_SQRT2 = 1.0 / math.sqrt(2.0)
_LANE = 128


def _round_up(x, m):
    return ((x + m - 1) // m) * m


def _sublane_packing(dtype):
    # Rows per packed (sublane, lane) tile: 8 for 4-byte, 16 for 2-byte, 32 for 1-byte.
    return max(8, 32 // jnp.dtype(dtype).itemsize)


def _vmem_budget_bytes():
    """Per-chip scoped-VMEM limit with headroom for Mosaic scratch / semaphores."""
    phys = None
    try:
        phys = int(getattr(pltpu.get_tpu_info(), "vmem_capacity_bytes", 0)) or None
    except Exception:
        phys = None
    if phys is None:
        phys = 64 * 1024 * 1024  # conservative fallback = v7x per-TC VMEM
    return min(phys - 12 * 1024 * 1024, 100 * 1024 * 1024)


def _gelu_exact_f32(h):
    # PyTorch nn.GELU default (exact): 0.5 * x * (1 + erf(x / sqrt(2))), in f32.
    return 0.5 * h * (1.0 + jax.lax.erf(h * jnp.float32(_INV_SQRT2)))


def _mlp_kernel_resident(x_ref, w1_ref, b1_ref, w2_ref, b2_ref, o_ref):
    # fc1: operands in the weight dtype (bf16-friendly) on the MXU, f32 accumulate.
    h = jnp.dot(x_ref[...].astype(w1_ref.dtype), w1_ref[...],
                preferred_element_type=jnp.float32)
    h = _gelu_exact_f32(h + b1_ref[...].astype(jnp.float32))
    # fc2: cast activation back to the weight dtype for the MXU, f32 accumulate.
    y = jnp.dot(h.astype(w2_ref.dtype), w2_ref[...],
                preferred_element_type=jnp.float32)
    y = y + b2_ref[...].astype(jnp.float32)
    # Dropout(p=0.0) is an identity (also identity in eval mode).
    # TODO(synk): nonzero dropout would need pltpu.prng_seed + prng_random_bits masking.
    o_ref[...] = y.astype(o_ref.dtype)


def _mlp_kernel_ksplit(x_ref, w1_ref, b1_ref, w2_ref, b2_ref, o_ref, acc_ref):
    # hid-streamed path: per k step compute a hid-slice of fc1 -> GELU and
    # accumulate its partial fc2 contribution into an f32 scratch.
    k = pl.program_id(1)

    @pl.when(k == 0)
    def _():
        acc_ref[...] = jnp.zeros_like(acc_ref)

    h = jnp.dot(x_ref[...].astype(w1_ref.dtype), w1_ref[...],
                preferred_element_type=jnp.float32)
    h = _gelu_exact_f32(h + b1_ref[...].astype(jnp.float32))
    acc_ref[...] += jnp.dot(h.astype(w2_ref.dtype), w2_ref[...],
                            preferred_element_type=jnp.float32)

    @pl.when(k == pl.num_programs(1) - 1)
    def _():
        o_ref[...] = (acc_ref[...] + b2_ref[...].astype(jnp.float32)
                      ).astype(o_ref.dtype)


@functools.partial(jax.jit, static_argnames=("tm", "path", "th"))
def mlp_forward(x, w1, b1, w2, b2, *, tm=None, path="auto", th=None):
    """x: (B, N, in_feat); w1: (in_feat, hid); w2: (hid, out). Returns (B, N, out)."""
    B, N, in_feat = x.shape
    hid = w1.shape[1]
    out_feat = w2.shape[1]
    M = B * N
    x2 = x.reshape(M, in_feat)

    xb = jnp.dtype(x.dtype).itemsize
    wb = jnp.dtype(w1.dtype).itemsize
    ob = xb  # output kept in x.dtype

    # --- lane-dense hid / out_feat: pad weights/biases (exact: GELU(0)=0 and
    # padded weight rows/cols are zero), slice the output back. in_feat is left
    # as-is (block dim == full array dim is allowed) to avoid an x round-trip.
    hid_p = _round_up(hid, _LANE)
    out_p = _round_up(out_feat, _LANE)
    if hid_p != hid:
        w1 = jnp.pad(w1, ((0, 0), (0, hid_p - hid)))
        b1 = jnp.pad(b1, ((0, hid_p - hid),))
        w2 = jnp.pad(w2, ((0, hid_p - hid), (0, 0)))
    if out_p != out_feat:
        w2 = jnp.pad(w2, ((0, 0), (0, out_p - out_feat)))
        b2 = jnp.pad(b2, ((0, out_p - out_feat),))

    budget = _vmem_budget_bytes()
    usable = int(budget * 0.8)
    packing = _sublane_packing(x.dtype)

    # M tile: big when VMEM is plentiful (v5e/v6e 128 MiB), smaller on v7x (64 MiB).
    if tm is None:
        tm = 512 if budget >= 80 * 1024 * 1024 else 256
    tm_eff = min(tm, max(packing, _round_up(M, packing)))
    # Give the megacore (v7x: 2 TCs) at least two M tiles for small batches;
    # on 1-TC chips the extra grid step costs ~0.35us (negligible).
    if M >= 2 * packing:
        tm_eff = min(tm_eff, _round_up(-(-M // 2), packing))

    def resident_bytes(t):
        weights = (in_feat * hid_p + hid_p + hid_p * out_p + out_p) * wb  # Buffered(1)
        tiles = 2 * t * in_feat * xb + 2 * t * out_p * ob                 # dbl-buffered
        interm = t * hid_p * 4 + t * out_p * 4                            # f32 h, y
        return weights + tiles + interm

    def ksplit_bytes(t, tk):
        stream = 2 * (in_feat * tk + tk + tk * out_p) * wb + out_p * wb
        tiles = 2 * t * in_feat * xb + 2 * t * out_p * ob
        interm = t * tk * 4 + t * out_p * 4                               # h slice + acc
        return stream + tiles + interm

    if path == "resident":
        use_ksplit = False
    elif path == "ksplit":
        use_ksplit = True
    else:  # "auto": prefer resident weights when they (plus tiles) fit VMEM
        t = tm_eff
        while t > max(packing, 128) and resident_bytes(t) > usable:
            t = max(packing, _round_up(t // 2, packing))
        if resident_bytes(t) <= usable:
            use_ksplit = False
            tm_eff = t
        else:
            use_ksplit = True

    if use_ksplit:
        if th is None:
            th = next(c for c in (1024, 512, 256, 128) if hid_p % c == 0)
        if hid_p % th != 0:
            th = 128  # always divides the lane-padded hid
        while tm_eff > max(packing, 128) and ksplit_bytes(tm_eff, th) > usable:
            tm_eff = max(packing, _round_up(tm_eff // 2, packing))

    b1_2d = b1.reshape(1, hid_p)
    b2_2d = b2.reshape(1, out_p)
    single = pl.Buffered(1)  # constant-index operands: one resident copy, no dbl buffer

    cost = pl.CostEstimate(
        flops=int(2 * M * (in_feat * hid_p + hid_p * out_p)),
        transcendentals=int(M * hid_p),
        bytes_accessed=int(M * in_feat * xb
                           + (in_feat * hid_p + hid_p + hid_p * out_p + out_p) * wb
                           + M * out_p * ob),
    )

    if not use_ksplit:
        grid = (pl.cdiv(M, tm_eff),)
        y2 = pl.pallas_call(
            _mlp_kernel_resident,
            out_shape=jax.ShapeDtypeStruct((M, out_p), x.dtype),
            grid_spec=pltpu.PrefetchScalarGridSpec(
                num_scalar_prefetch=0,
                grid=grid,
                in_specs=[
                    pl.BlockSpec((tm_eff, in_feat), lambda i: (i, 0)),           # x tile
                    pl.BlockSpec((in_feat, hid_p), lambda i: (0, 0),
                                 pipeline_mode=single),                           # w1
                    pl.BlockSpec((1, hid_p), lambda i: (0, 0),
                                 pipeline_mode=single),                           # b1
                    pl.BlockSpec((hid_p, out_p), lambda i: (0, 0),
                                 pipeline_mode=single),                           # w2
                    pl.BlockSpec((1, out_p), lambda i: (0, 0),
                                 pipeline_mode=single),                           # b2
                ],
                out_specs=pl.BlockSpec((tm_eff, out_p), lambda i: (i, 0)),
            ),
            compiler_params=pltpu.CompilerParams(
                dimension_semantics=("parallel",),
                vmem_limit_bytes=budget,
            ),
            cost_estimate=cost,
        )(x2, w1, b1_2d, w2, b2_2d)
    else:
        grid = (pl.cdiv(M, tm_eff), hid_p // th)
        y2 = pl.pallas_call(
            _mlp_kernel_ksplit,
            out_shape=jax.ShapeDtypeStruct((M, out_p), x.dtype),
            grid_spec=pltpu.PrefetchScalarGridSpec(
                num_scalar_prefetch=0,
                grid=grid,
                in_specs=[
                    pl.BlockSpec((tm_eff, in_feat), lambda i, k: (i, 0)),  # x tile
                    pl.BlockSpec((in_feat, th), lambda i, k: (0, k)),      # w1 col-block
                    pl.BlockSpec((1, th), lambda i, k: (0, k)),            # b1 slice
                    pl.BlockSpec((th, out_p), lambda i, k: (k, 0)),        # w2 row-block
                    pl.BlockSpec((1, out_p), lambda i, k: (0, 0),
                                 pipeline_mode=single),                    # b2
                ],
                out_specs=pl.BlockSpec((tm_eff, out_p), lambda i, k: (i, 0)),
                scratch_shapes=[pltpu.VMEM((tm_eff, out_p), jnp.float32)],
            ),
            compiler_params=pltpu.CompilerParams(
                dimension_semantics=("parallel", "arbitrary"),
                vmem_limit_bytes=budget,
            ),
            cost_estimate=cost,
        )(x2, w1, b1_2d, w2, b2_2d)

    if out_p != out_feat:
        y2 = y2[:, :out_feat]
    return y2.reshape(B, N, out_feat)


def init_mlp_params(key, in_feat, hid_feat=None, out_feat=None, dtype=jnp.float32):
    """Deterministic init mirroring nn.Linear default (uniform +/- 1/sqrt(fan_in))."""
    if not hid_feat:
        hid_feat = in_feat
    if not out_feat:
        out_feat = in_feat
    k1, k2, k3, k4 = jax.random.split(key, 4)
    lim1 = 1.0 / math.sqrt(in_feat)
    lim2 = 1.0 / math.sqrt(hid_feat)
    # Stored already-transposed: (in, out) so the kernel does x @ W.
    w1 = jax.random.uniform(k1, (in_feat, hid_feat), dtype, -lim1, lim1)
    b1 = jax.random.uniform(k2, (hid_feat,), dtype, -lim1, lim1)
    w2 = jax.random.uniform(k3, (hid_feat, out_feat), dtype, -lim2, lim2)
    b2 = jax.random.uniform(k4, (out_feat,), dtype, -lim2, lim2)
    return w1, b1, w2, b2


def _reference(x, w1, b1, w2, b2):
    h = jnp.einsum("bnd,dh->bnh", x, w1) + b1
    h = 0.5 * h * (1.0 + jax.lax.erf(h / jnp.sqrt(2.0)))
    return jnp.einsum("bnh,ho->bno", h, w2) + b2


if __name__ == "__main__":
    key = jax.random.PRNGKey(0)
    kx, kp, kp2 = jax.random.split(key, 3)

    # Small shapes consistent with the module: tokens (B, N, in_feat).
    B, N, in_feat, hid_feat, out_feat = 2, 8, 32, 64, 32
    x = jax.random.normal(kx, (B, N, in_feat), jnp.float32)
    w1, b1, w2, b2 = init_mlp_params(kp, in_feat, hid_feat, out_feat)

    # Default (auto) path -> resident weights for these sizes.
    y = jax.block_until_ready(mlp_forward(x, w1, b1, w2, b2))
    y_ref = _reference(x, w1, b1, w2, b2)
    assert y.shape == (B, N, out_feat)
    assert jnp.allclose(y, y_ref, atol=1e-4, rtol=1e-4)

    # Also exercise the hid-streamed accumulator path (the v7x scaling path,
    # used automatically when resident weights don't fit VMEM).
    hid2 = 256
    w1b, b1b, w2b, b2b = init_mlp_params(kp2, in_feat, hid2, out_feat)
    y2 = jax.block_until_ready(
        mlp_forward(x, w1b, b1b, w2b, b2b, path="ksplit", th=128))
    y2_ref = _reference(x, w1b, b1b, w2b, b2b)
    assert y2.shape == (B, N, out_feat)
    assert jnp.allclose(y2, y2_ref, atol=1e-4, rtol=1e-4)

    print("KERNEL_OK")
</pallas_src>

<mosaic_0001>
module attributes {stable_mosaic.version = 11 : i64} {
  func.func @_mlp_kernel_resident(%arg0: i32, %arg1: memref<8x32xf32, #tpu.memory_space<vmem>>, %arg2: memref<32x128xf32, #tpu.memory_space<vmem>>, %arg3: memref<1x128xf32, #tpu.memory_space<vmem>>, %arg4: memref<128x128xf32, #tpu.memory_space<vmem>>, %arg5: memref<1x128xf32, #tpu.memory_space<vmem>>, %arg6: memref<8x128xf32, #tpu.memory_space<vmem>>) attributes {dimension_semantics = [#tpu.dimension_semantics<parallel>], iteration_bounds = array<i64: 2>, scalar_prefetch = 0 : i64, scratch_operands = 0 : i64, tpu.core_type = #tpu.core_type<tc>, window_params = [{transform_indices = @transform_0, window_bounds = array<i64: 8, 32>}, {pipeline_mode = #tpu.pipeline_mode<synchronous>, transform_indices = @transform_1, window_bounds = array<i64: 32, 128>}, {pipeline_mode = #tpu.pipeline_mode<synchronous>, transform_indices = @transform_2, window_bounds = array<i64: 1, 128>}, {pipeline_mode = #tpu.pipeline_mode<synchronous>, transform_indices = @transform_3, window_bounds = array<i64: 128, 128>}, {pipeline_mode = #tpu.pipeline_mode<synchronous>, transform_indices = @transform_4, window_bounds = array<i64: 1, 128>}, {transform_indices = @transform_5, window_bounds = array<i64: 8, 128>}]} {
    %c0 = arith.constant 0 : index
    %c0_0 = arith.constant 0 : index
    %0 = vector.load %arg1[%c0, %c0_0] : memref<8x32xf32, #tpu.memory_space<vmem>>, vector<8x32xf32>
    %c0_1 = arith.constant 0 : index
    %c0_2 = arith.constant 0 : index
    %1 = vector.load %arg2[%c0_1, %c0_2] : memref<32x128xf32, #tpu.memory_space<vmem>>, vector<32x128xf32>
    %cst = arith.constant dense<0.000000e+00> : vector<8x128xf32>
    %2 = tpu.matmul %0, %1, %cst {dimension_numbers = #tpu.dot_dimension_numbers<[1], [0], [0], [1], [0, 0, 1, 1], [], []>} : vector<8x32xf32>, vector<32x128xf32>, vector<8x128xf32> -> vector<8x128xf32>
    %c0_3 = arith.constant 0 : index
    %c0_4 = arith.constant 0 : index
    %3 = vector.load %arg3[%c0_3, %c0_4] : memref<1x128xf32, #tpu.memory_space<vmem>>, vector<1x128xf32>
    %4 = vector.broadcast %3 : vector<1x128xf32> to vector<8x128xf32>
    %5 = arith.addf %2, %4 : vector<8x128xf32>
    %cst_5 = arith.constant 5.000000e-01 : f32
    %6 = vector.broadcast %cst_5 : f32 to vector<8x128xf32>
    %7 = arith.mulf %6, %5 : vector<8x128xf32>
    %cst_6 = arith.constant 0.707106769 : f32
    %8 = vector.broadcast %cst_6 : f32 to vector<8x128xf32>
    %9 = arith.mulf %5, %8 : vector<8x128xf32>
    %10 = math.erf %9 : vector<8x128xf32>
    %cst_7 = arith.constant 1.000000e+00 : f32
    %11 = vector.broadcast %cst_7 : f32 to vector<8x128xf32>
    %12 = arith.addf %11, %10 : vector<8x128xf32>
    %13 = arith.mulf %7, %12 : vector<8x128xf32>
    %c0_8 = arith.constant 0 : index
    %c0_9 = arith.constant 0 : index
    %14 = vector.load %arg4[%c0_8, %c0_9] : memref<128x128xf32, #tpu.memory_space<vmem>>, vector<128x128xf32>
    %cst_10 = arith.constant dense<0.000000e+00> : vector<8x128xf32>
    %15 = tpu.matmul %13, %14, %cst_10 {dimension_numbers = #tpu.dot_dimension_numbers<[1], [0], [0], [1], [0, 0, 1, 1], [], []>} : vector<8x128xf32>, vector<128x128xf32>, vector<8x128xf32> -> vector<8x128xf32>
    %c0_11 = arith.constant 0 : index
    %c0_12 = arith.constant 0 : index
    %16 = vector.load %arg5[%c0_11, %c0_12] : memref<1x128xf32, #tpu.memory_space<vmem>>, vector<1x128xf32>
    %17 = vector.broadcast %16 : vector<1x128xf32> to vector<8x128xf32>
    %18 = arith.addf %15, %17 : vector<8x128xf32>
    %c0_13 = arith.constant 0 : index
    %c0_14 = arith.constant 0 : index
    %19 = vector.load %arg6[%c0_13, %c0_14] : memref<8x128xf32, #tpu.memory_space<vmem>>, vector<8x128xf32>
    tpu.vector_store %arg6[%c0_13, %c0_14], %18 {strides = array<i32>} : memref<8x128xf32, #tpu.memory_space<vmem>>, vector<8x128xf32>,
    return
  }
  func.func @transform_0(%arg0: i32) -> (i32, i32) {
    %c0_i32 = arith.constant 0 : i32
    %c0_i32_0 = arith.constant 0 : i32
    return %arg0, %c0_i32 : i32, i32
  }
  func.func @transform_1(%arg0: i32) -> (i32, i32) {
    %c0_i32 = arith.constant 0 : i32
    %c0_i32_0 = arith.constant 0 : i32
    %c0_i32_1 = arith.constant 0 : i32
    return %c0_i32, %c0_i32_0 : i32, i32
  }
  func.func @transform_2(%arg0: i32) -> (i32, i32) {
    %c0_i32 = arith.constant 0 : i32
    %c0_i32_0 = arith.constant 0 : i32
    %c0_i32_1 = arith.constant 0 : i32
    return %c0_i32, %c0_i32_0 : i32, i32
  }
  func.func @transform_3(%arg0: i32) -> (i32, i32) {
    %c0_i32 = arith.constant 0 : i32
    %c0_i32_0 = arith.constant 0 : i32
    %c0_i32_1 = arith.constant 0 : i32
    return %c0_i32, %c0_i32_0 : i32, i32
  }
  func.func @transform_4(%arg0: i32) -> (i32, i32) {
    %c0_i32 = arith.constant 0 : i32
    %c0_i32_0 = arith.constant 0 : i32
    %c0_i32_1 = arith.constant 0 : i32
    return %c0_i32, %c0_i32_0 : i32, i32
  }
  func.func @transform_5(%arg0: i32) -> (i32, i32) {
    %c0_i32 = arith.constant 0 : i32
    %c0_i32_0 = arith.constant 0 : i32
    return %arg0, %c0_i32 : i32, i32
  }
}

</mosaic_0001>

<llo_original>
// kernel: mlp_forward.1
$region0: #{mlp_forward.1}
  #allocation0 [shape = 'u32[]', space=smem, size = 0x4, offset = 0x4, fixed_abs, tag = 'smem constant byte address 0x4 - core index']
  #allocation1 [shape = 'u32[144,128]{1,0:T(1,128)}', space=vmem, size = 0x12000, scoped, tag = 'internal scratch']
  %s0 = inlined_call_operand.vmem [shape: f32[16,32], index: 0, kind: input, shape index: {}]
  %s1 = inlined_call_operand.vmem [shape: f32[32,128], index: 1, kind: input, shape index: {}]
  %s2 = inlined_call_operand.vmem [shape: f32[1,128], index: 2, kind: input, shape index: {}]
  %s3 = inlined_call_operand.vmem [shape: f32[128,128], index: 3, kind: input, shape index: {}]
  %s4 = inlined_call_operand.vmem [shape: f32[1,128], index: 4, kind: input, shape index: {}]
  %s5 = inlined_call_operand.vmem [shape: f32[16,128], index: 5, kind: output, shape index: {}]
  %s6 = sld [smem:[#allocation0]]
  $region53: #{mlp_forward.1} parent=0
    _
  %s8 = ssub.s32 1, %s6
  %s9 = scalar_select 0, %s8, %s6
  loop: start=0, step=1, limit=4
  $region2: #{mlp_forward.1} parent=0 // loop_pre_header
    _
  $region3: #{mlp_forward.1} parent=0 // loop_header
    %s11 = sphi 0, %s15
    %p12 = scmp.ge.s32.totalorder %s11, 4
    %s21 = sphi 0, %s23
    %s24 = sphi 0, %s21
    %s25 = sphi 0, %s24
    %s41 = sphi 0, %s25
    %s45 = sphi 0, %s45
    %s47 = sphi 0, %s45
    %s48 = sphi 0, %s47
    %s62 = sphi 0, %s48
    %s66 = sphi 0, %s66
    %s68 = sphi 0, %s66
    %s69 = sphi 0, %s68
    %s83 = sphi 0, %s69
    %s87 = sphi 0, %s87
    %s89 = sphi 0, %s87
    %s90 = sphi 0, %s89
    %s104 = sphi 0, %s90
    %s108 = sphi 0, %s108
    %s110 = sphi 0, %s108
    %s111 = sphi 0, %s110
    %s125 = sphi 0, %s111
    %s131 = sphi 0, %s133
    %s134 = sphi 0, %s131
    %s135 = sphi 0, %s134
    %s151 = sphi 0, %s135
  $region4: #{mlp_forward.1} parent=0 // loop_header_branch
    %14 = sbr.rel (%p12) target = $region8
  $region5: #{mlp_forward.1} parent=0 // loop_body
    %s16 = ssub.s32 %s11, 1
    %s17 = ssub.s32 %s11, 2
    %s18 = sadd.s32 %s11, 1
    %s19 = ssub.s32 %s11, %s18
    %p20 = scmp.eq.s32.totalorder %s19, 0
    %s22 = sadd.s32 %s21, 1
    %s23 = scalar_select %p20, %s21, %s22
    %p26 = pneg %p20
    %p27 = scmp.eq.s32.totalorder %s11, 1
    %p28 = por %p26, %p27
    %p29 = scmp.ne.s32.totalorder %s21, %s24
    %p30 = scmp.eq.s32.totalorder %s11, 0
    %p31 = por %p29, %p30
    %p32 = scmp.ne.s32.totalorder %s21, %s24
    %p33 = scmp.eq.s32.totalorder %s16, 1
    %p34 = por %p32, %p33
    %p35 = scmp.ne.s32.totalorder %s24, %s25
    %p36 = scmp.eq.s32.totalorder %s16, 0
    %p37 = por %p35, %p36
    %p38 = scmp.ne.s32.totalorder %s24, %s25
    %p39 = scmp.eq.s32.totalorder %s17, 1
    %p40 = por %p38, %p39
    %p42 = scmp.ne.s32.totalorder %s25, %s41
    %p43 = scmp.eq.s32.totalorder %s17, 0
    %p44 = por %p42, %p43
    %s46 = sadd.s32 %s45, 1
    %p49 = scmp.eq.s32.totalorder %s11, 1
    %p50 = scmp.ne.s32.totalorder %s45, %s47
    %p51 = scmp.eq.s32.totalorder %s11, 0
    %p52 = por %p50, %p51
    %p53 = scmp.ne.s32.totalorder %s45, %s47
    %p54 = scmp.eq.s32.totalorder %s16, 1
    %p55 = por %p53, %p54
    %p56 = scmp.ne.s32.totalorder %s47, %s48
    %p57 = scmp.eq.s32.totalorder %s16, 0
    %p58 = por %p56, %p57
    %p59 = scmp.ne.s32.totalorder %s47, %s48
    %p60 = scmp.eq.s32.totalorder %s17, 1
    %p61 = por %p59, %p60
    %p63 = scmp.ne.s32.totalorder %s48, %s62
    %p64 = scmp.eq.s32.totalorder %s17, 0
    %p65 = por %p63, %p64
    %s67 = sadd.s32 %s66, 1
    %p70 = scmp.eq.s32.totalorder %s11, 1
    %p71 = scmp.ne.s32.totalorder %s66, %s68
    %p72 = scmp.eq.s32.totalorder %s11, 0
    %p73 = por %p71, %p72
    %p74 = scmp.ne.s32.totalorder %s66, %s68
    %p75 = scmp.eq.s32.totalorder %s16, 1
    %p76 = por %p74, %p75
    %p77 = scmp.ne.s32.totalorder %s68, %s69
    %p78 = scmp.eq.s32.totalorder %s16, 0
    %p79 = por %p77, %p78
    %p80 = scmp.ne.s32.totalorder %s68, %s69
    %p81 = scmp.eq.s32.totalorder %s17, 1
    %p82 = por %p80, %p81
    %p84 = scmp.ne.s32.totalorder %s69, %s83
    %p85 = scmp.eq.s32.totalorder %s17, 0
    %p86 = por %p84, %p85
    %s88 = sadd.s32 %s87, 1
    %p91 = scmp.eq.s32.totalorder %s11, 1
    %p92 = scmp.ne.s32.totalorder %s87, %s89
    %p93 = scmp.eq.s32.totalorder %s11, 0
    %p94 = por %p92, %p93
    %p95 = scmp.ne.s32.totalorder %s87, %s89
    %p96 = scmp.eq.s32.totalorder %s16, 1
    %p97 = por %p95, %p96
    %p98 = scmp.ne.s32.totalorder %s89, %s90
    %p99 = scmp.eq.s32.totalorder %s16, 0
    %p100 = por %p98, %p99
    %p101 = scmp.ne.s32.totalorder %s89, %s90
    %p102 = scmp.eq.s32.totalorder %s17, 1
    %p103 = por %p101, %p102
    %p105 = scmp.ne.s32.totalorder %s90, %s104
    %p106 = scmp.eq.s32.totalorder %s17, 0
    %p107 = por %p105, %p106
    %s109 = sadd.s32 %s108, 1
    %p112 = scmp.eq.s32.totalorder %s11, 1
    %p113 = scmp.ne.s32.totalorder %s108, %s110
    %p114 = scmp.eq.s32.totalorder %s11, 0
    %p115 = por %p113, %p114
    %p116 = scmp.ne.s32.totalorder %s108, %s110
    %p117 = scmp.eq.s32.totalorder %s16, 1
    %p118 = por %p116, %p117
    %p119 = scmp.ne.s32.totalorder %s110, %s111
    %p120 = scmp.eq.s32.totalorder %s16, 0
    %p121 = por %p119, %p120
    %p122 = scmp.ne.s32.totalorder %s110, %s111
    %p123 = scmp.eq.s32.totalorder %s17, 1
    %p124 = por %p122, %p123
    %p126 = scmp.ne.s32.totalorder %s111, %s125
    %p127 = scmp.eq.s32.totalorder %s17, 0
    %p128 = por %p126, %p127
    %s129 = ssub.s32 %s11, %s18
    %p130 = scmp.eq.s32.totalorder %s129, 0
    %s132 = sadd.s32 %s131, 1
    %s133 = scalar_select %p130, %s131, %s132
    %p136 = pneg %p130
    %p137 = scmp.eq.s32.totalorder %s11, 1
    %p138 = por %p136, %p137
    %p139 = scmp.ne.s32.totalorder %s131, %s134
    %p140 = scmp.eq.s32.totalorder %s11, 0
    %p141 = por %p139, %p140
    %p142 = scmp.ne.s32.totalorder %s131, %s134
    %p143 = scmp.eq.s32.totalorder %s16, 1
    %p144 = por %p142, %p143
    %p145 = scmp.ne.s32.totalorder %s134, %s135
    %p146 = scmp.eq.s32.totalorder %s16, 0
    %p147 = por %p145, %p146
    %p148 = scmp.ne.s32.totalorder %s134, %s135
    %p149 = scmp.eq.s32.totalorder %s17, 1
    %p150 = por %p148, %p149
    %p152 = scmp.ne.s32.totalorder %s135, %s151
    %p153 = scmp.eq.s32.totalorder %s17, 0
    %p154 = por %p152, %p153
    %p155 = scmp.le.s32.totalorder 1, %s11
    %p156 = scmp.lt.s32.totalorder %s11, 3
    %p157 = pnand %p155, %p156
    %p158 = pneg %p157
    // Predicated region
    $region9: #{mlp_forward.1} parent=5 // pred_check
      _
    $region10: #{mlp_forward.1} parent=5 // pred_check_branch
      %160 = sbr.rel (%p157) target = $region12
    $region11: #{mlp_forward.1} parent=5 // pred_region
      %s161 = ssub.s32 %s11, 1
      // Predicated region
      $region13: #{mlp_forward.1} parent=11 // pred_check
        %p162 = pneg %p58
      $region14: #{mlp_forward.1} parent=11 // pred_check_branch
        %164 = sbr.rel (%p162) target = $region16
      $region15: #{mlp_forward.1} parent=11 // pred_region
        _
      $region16: #{mlp_forward.1} parent=11 // pred_fallthru
        _
      // Predicated region
      $region17: #{mlp_forward.1} parent=11 // pred_check
        %p165 = pneg %p79
      $region18: #{mlp_forward.1} parent=11 // pred_check_branch
        %167 = sbr.rel (%p165) target = $region20
      $region19: #{mlp_forward.1} parent=11 // pred_region
        _
      $region20: #{mlp_forward.1} parent=11 // pred_fallthru
        _
      // Predicated region
      $region21: #{mlp_forward.1} parent=11 // pred_check
        %p168 = pneg %p100
      $region22: #{mlp_forward.1} parent=11 // pred_check_branch
        %170 = sbr.rel (%p168) target = $region24
      $region23: #{mlp_forward.1} parent=11 // pred_region
        _
      $region24: #{mlp_forward.1} parent=11 // pred_fallthru
        _
      // Predicated region
      $region25: #{mlp_forward.1} parent=11 // pred_check
        %p171 = pneg %p121
      $region26: #{mlp_forward.1} parent=11 // pred_check_branch
        %173 = sbr.rel (%p171) target = $region28
      $region27: #{mlp_forward.1} parent=11 // pred_region
        _
      $region28: #{mlp_forward.1} parent=11 // pred_fallthru
        _
    $region12: #{mlp_forward.1} parent=5 // pred_fallthru
      _
    %p174 = scmp.lt.s32.totalorder %s11, 2
    // Predicated region
    $region29: #{mlp_forward.1} parent=5 // pred_check
      %p175 = pneg %p174
    $region30: #{mlp_forward.1} parent=5 // pred_check_branch
      %177 = sbr.rel (%p175) target = $region32
    $region31: #{mlp_forward.1} parent=5 // pred_region
      // Predicated region
      $region33: #{mlp_forward.1} parent=31 // pred_check
        %p178 = pneg %p31
      $region34: #{mlp_forward.1} parent=31 // pred_check_branch
        %180 = sbr.rel (%p178) target = $region36
      $region35: #{mlp_forward.1} parent=31 // pred_region
        %p181 = scmp.lt.s32.totalorder %s11, 1
        %s182 = scalar_select %p181, %s11, 1
        %s183 = smul.addr %s182, 8
        %s184 = scalar_lea.vmem %s0, %s183
      $region36: #{mlp_forward.1} parent=31 // pred_fallthru
        _
    $region32: #{mlp_forward.1} parent=5 // pred_fallthru
      _
    %p185 = scmp.le.s32.totalorder 1, %s11
    %p186 = scmp.lt.s32.totalorder %s11, 3
    %p187 = pnand %p185, %p186
    %p188 = pneg %p187
    // Predicated region
    $region37: #{mlp_forward.1} parent=5 // pred_check
      _
    $region38: #{mlp_forward.1} parent=5 // pred_check_branch
      %190 = sbr.rel (%p187) target = $region40
    $region39: #{mlp_forward.1} parent=5 // pred_region
      %s191 = ssub.s32 %s11, 1
      %p192 = scmp.lt.s32.totalorder %s16, 1
      %s193 = scalar_select %p192, %s16, 1
      %s194 = smul.addr %s193, 8
      %s195 = scalar_lea.vmem %s0, %s194
      %p196 = pneg %p37
      %p197 = pneg %p34
      %p198 = pneg %p58
      %p199 = pneg %p55
      %p200 = pneg %p79
      %p201 = pneg %p76
      %p202 = pneg %p100
      %p203 = pneg %p97
      %p204 = pneg %p121
      %p205 = pneg %p118
      %p206 = pneg %p147
      %p207 = pneg %p144
      %p208 = scmp.lt.s32.totalorder %s16, 1
      %s209 = scalar_select %p208, %s16, 1
      %s210 = smul.addr %s209, 8
      %s211 = scalar_lea.vmem %s5, %s210
      %p212 = scmp.lt.s32.totalorder %s16, 1
      %s213 = scalar_select %p212, %s16, 1
      %s214 = smul.addr %s213, 8
      %s215 = scalar_lea.vmem %s0, %s214
      %p216 = scmp.lt.s32.totalorder %s16, 1
      %s217 = scalar_select %p216, %s16, 1
      %s218 = smul.addr %s217, 8
      %s219 = scalar_lea.vmem %s5, %s218
      %v220 = vld [vmem:[%s215] sm:$0xff]
      %v221 = vld [vmem:[%s1] sm:$0xff]
      %v222 = vld [vmem:[%s1 + $0x8] sm:$0xff]
      %v223 = vld [vmem:[%s1 + $0x10] sm:$0xff]
      %v224 = vld [vmem:[%s1 + $0x18] sm:$0xff]
      %v225 = vld [vmem:[%s2] sm:$0x1]
      %v227 = vlaneseq
      %v228 = vshrl.u32 %v227, 7
      %v229 = vsub.s32 0, %v228
      %v230 = vrot.slane %v225, %v229
      %vm232 = vcmask 261120
      %v234 = vsel %vm232, %v220, 0
      %236 = vmatprep.subr.mxu0 0.0
      %237 = vmatpush1.msra.mxu0 0.0
      %238 = vmatprep.subr.mxu0 0.0
      %239 = vmatpush1.msra.mxu0 0.0
      %240 = vmatprep.subr.mxu0 0.0
      %241 = vmatpush1.msra.mxu0 0.0
      %242 = vmatprep.subr.mxu0 0.0
      %243 = vmatpush1.msra.mxu0 0.0
      %244 = vmatprep.subr.mxu0 0.0
      %245 = vmatpush1.msra.mxu0 0.0
      %246 = vmatprep.subr.mxu0 0.0
      %247 = vmatpush1.msra.mxu0 0.0
      %248 = vmatprep.subr.mxu0 0.0
      %249 = vmatpush1.msra.mxu0 0.0
      %250 = vmatprep.subr.mxu0 0.0
      %251 = vmatpush1.msra.mxu0 0.0
      %252 = vmatprep.subr.mxu0 0.0
      %253 = vmatpush1.msra.mxu0 0.0
      %254 = vmatprep.subr.mxu0 0.0
      %255 = vmatpush1.msra.mxu0 0.0
      %256 = vmatprep.subr.mxu0 0.0
      %257 = vmatpush1.msra.mxu0 0.0
      %258 = vmatprep.subr.mxu0 0.0
      %259 = vmatpush1.msra.mxu0 0.0
      %260 = vmatprep.subr.mxu0 0.0
      %261 = vmatpush1.msra.mxu0 %v224
      %262 = vmatprep.subr.mxu0 0.0
      %263 = vmatpush1.msra.mxu0 %v223
      %264 = vmatprep.subr.mxu0 0.0
      %265 = vmatpush1.msra.mxu0 %v222
      %266 = vmatprep.subr.mxu0 0.0
      %267 = vmatpush1.msra.mxu0 %v221
      %268 = vmatprep.subr.mxu0 0.0
      %269 = vmatpush2.msra.mxu0 0.0
      %270 = vmatprep.subr.mxu0 0.0
      %271 = vmatpush2.msra.mxu0 0.0
      %272 = vmatprep.subr.mxu0 0.0
      %273 = vmatpush2.msra.mxu0 0.0
      %274 = vmatprep.subr.mxu0 0.0
      %275 = vmatpush2.msra.mxu0 0.0
      %276 = vmatprep.subr.mxu0 0.0
      %277 = vmatpush2.msra.mxu0 0.0
      %278 = vmatprep.subr.mxu0 0.0
      %279 = vmatpush2.msra.mxu0 0.0
      %280 = vmatprep.subr.mxu0 0.0
      %281 = vmatpush2.msra.mxu0 0.0
      %282 = vmatprep.subr.mxu0 0.0
      %283 = vmatpush2.msra.mxu0 0.0
      %284 = vmatprep.subr.mxu0 0.0
      %285 = vmatpush2.msra.mxu0 0.0
      %286 = vmatprep.subr.mxu0 0.0
      %287 = vmatpush2.msra.mxu0 0.0
      %288 = vmatprep.subr.mxu0 0.0
      %289 = vmatpush2.msra.mxu0 0.0
      %290 = vmatprep.subr.mxu0 0.0
      %291 = vmatpush2.msra.mxu0 0.0
      %292 = vmatprep.subr.mxu0 0.0
      %293 = vmatpush2.msra.mxu0 0.0
      %294 = vmatprep.subr.mxu0 0.0
      %295 = vmatpush2.msra.mxu0 0.0
      %296 = vmatprep.subr.mxu0 0.0
      %297 = vmatpush2.msra.mxu0 0.0
      %298 = vmatprep.subr.mxu0 0.0
      %299 = vmatpush2.msra.mxu0 0.0
      %300 = vmatprep.mubr.f32.mxu0 0.0
      %301 = vmatmul.mubr.f32.gmra.mxu0 %v234
      %v302 = vpop.f32.mrf.mxu0
      %v303 = vadd.f32 %v230, %v302
      %v304 = vpop.f32.mrf.mxu0
      %305 = vdwg.mxu0
      %v306 = vmul.f32 %v303, 0.5
      %v307 = vmul.f32 %v303, 0.70710677
      %v308 = verf.f32.pop %v307
      %v309 = vadd.f32 %v308, 1.0
      %v310 = vmul.f32 %v306, %v309
      %v311 = vld [vmem:[%s3] sm:$0xff]
      %v312 = vld [vmem:[%s3 + $0x8] sm:$0xff]
      %v313 = vld [vmem:[%s3 + $0x10] sm:$0xff]
      %v314 = vld [vmem:[%s3 + $0x18] sm:$0xff]
      %v315 = vld [vmem:[%s3 + $0x20] sm:$0xff]
      %v316 = vld [vmem:[%s3 + $0x28] sm:$0xff]
      %v317 = vld [vmem:[%s3 + $0x30] sm:$0xff]
      %v318 = vld [vmem:[%s3 + $0x38] sm:$0xff]
      %v319 = vld [vmem:[%s3 + $0x40] sm:$0xff]
      %v320 = vld [vmem:[%s3 + $0x48] sm:$0xff]
      %v321 = vld [vmem:[%s3 + $0x50] sm:$0xff]
      %v322 = vld [vmem:[%s3 + $0x58] sm:$0xff]
      %v323 = vld [vmem:[%s3 + $0x60] sm:$0xff]
      %v324 = vld [vmem:[%s3 + $0x68] sm:$0xff]
      %v325 = vld [vmem:[%s3 + $0x70] sm:$0xff]
      %v326 = vld [vmem:[%s3 + $0x78] sm:$0xff]
      %v327 = vld [vmem:[%s4] sm:$0x1]
      %v329 = vlaneseq
      %v330 = vshrl.u32 %v329, 7
      %v331 = vsub.s32 0, %v330
      %v332 = vrot.slane %v327, %v331
      %334 = vmatprep.subr.mxu0 0.0
      %335 = vmatpush1.msra.mxu0 %v326
      %336 = vmatprep.subr.mxu0 0.0
      %337 = vmatpush1.msra.mxu0 %v325
      %338 = vmatprep.subr.mxu0 0.0
      %339 = vmatpush1.msra.mxu0 %v324
      %340 = vmatprep.subr.mxu0 0.0
      %341 = vmatpush1.msra.mxu0 %v323
      %342 = vmatprep.subr.mxu0 0.0
      %343 = vmatpush1.msra.mxu0 %v322
      %344 = vmatprep.subr.mxu0 0.0
      %345 = vmatpush1.msra.mxu0 %v321
      %346 = vmatprep.subr.mxu0 0.0
      %347 = vmatpush1.msra.mxu0 %v320
      %348 = vmatprep.subr.mxu0 0.0
      %349 = vmatpush1.msra.mxu0 %v319
      %350 = vmatprep.subr.mxu0 0.0
      %351 = vmatpush1.msra.mxu0 %v318
      %352 = vmatprep.subr.mxu0 0.0
      %353 = vmatpush1.msra.mxu0 %v317
      %354 = vmatprep.subr.mxu0 0.0
      %355 = vmatpush1.msra.mxu0 %v316
      %356 = vmatprep.subr.mxu0 0.0
      %357 = vmatpush1.msra.mxu0 %v315
      %358 = vmatprep.subr.mxu0 0.0
      %359 = vmatpush1.msra.mxu0 %v314
      %360 = vmatprep.subr.mxu0 0.0
      %361 = vmatpush1.msra.mxu0 %v313
      %362 = vmatprep.subr.mxu0 0.0
      %363 = vmatpush1.msra.mxu0 %v312
      %364 = vmatprep.subr.mxu0 0.0
      %365 = vmatpush1.msra.mxu0 %v311
      %366 = vmatprep.subr.mxu0 0.0
      %367 = vmatpush2.msra.mxu0 0.0
      %368 = vmatprep.subr.mxu0 0.0
      %369 = vmatpush2.msra.mxu0 0.0
      %370 = vmatprep.subr.mxu0 0.0
      %371 = vmatpush2.msra.mxu0 0.0
      %372 = vmatprep.subr.mxu0 0.0
      %373 = vmatpush2.msra.mxu0 0.0
      %374 = vmatprep.subr.mxu0 0.0
      %375 = vmatpush2.msra.mxu0 0.0
      %376 = vmatprep.subr.mxu0 0.0
      %377 = vmatpush2.msra.mxu0 0.0
      %378 = vmatprep.subr.mxu0 0.0
      %379 = vmatpush2.msra.mxu0 0.0
      %380 = vmatprep.subr.mxu0 0.0
      %381 = vmatpush2.msra.mxu0 0.0
      %382 = vmatprep.subr.mxu0 0.0
      %383 = vmatpush2.msra.mxu0 0.0
      %384 = vmatprep.subr.mxu0 0.0
      %385 = vmatpush2.msra.mxu0 0.0
      %386 = vmatprep.subr.mxu0 0.0
      %387 = vmatpush2.msra.mxu0 0.0
      %388 = vmatprep.subr.mxu0 0.0
      %389 = vmatpush2.msra.mxu0 0.0
      %390 = vmatprep.subr.mxu0 0.0
      %391 = vmatpush2.msra.mxu0 0.0
      %392 = vmatprep.subr.mxu0 0.0
      %393 = vmatpush2.msra.mxu0 0.0
      %394 = vmatprep.subr.mxu0 0.0
      %395 = vmatpush2.msra.mxu0 0.0
      %396 = vmatprep.subr.mxu0 0.0
      %397 = vmatpush2.msra.mxu0 0.0
      %398 = vmatprep.mubr.f32.mxu0 0.0
      %399 = vmatmul.mubr.f32.gmra.mxu0 %v310
      %v400 = vpop.f32.mrf.mxu0
      %v401 = vadd.f32 %v332, %v400
      %v402 = vpop.f32.mrf.mxu0
      %403 = vdwg.mxu0
      %404 = vst [vmem:[%s219] sm:$0xff] %v401
      %p405 = scmp.lt.s32.totalorder %s16, 1
      %s406 = scalar_select %p405, %s16, 1
      %s407 = smul.addr %s406, 8
      %s408 = scalar_lea.vmem %s5, %s407
      // Predicated region
      $region41: #{mlp_forward.1} parent=39 // pred_check
        %p409 = pneg %p144
      $region42: #{mlp_forward.1} parent=39 // pred_check_branch
        %411 = sbr.rel (%p409) target = $region44
      $region43: #{mlp_forward.1} parent=39 // pred_region
        _
      $region44: #{mlp_forward.1} parent=39 // pred_fallthru
        _
    $region40: #{mlp_forward.1} parent=5 // pred_fallthru
      _
    %p412 = scmp.le.s32.totalorder 2, %s11
    // Predicated region
    $region45: #{mlp_forward.1} parent=5 // pred_check
      %p413 = pneg %p412
    $region46: #{mlp_forward.1} parent=5 // pred_check_branch
      %415 = sbr.rel (%p413) target = $region48
    $region47: #{mlp_forward.1} parent=5 // pred_region
      %s416 = ssub.s32 %s11, 2
      // Predicated region
      $region49: #{mlp_forward.1} parent=47 // pred_check
        %p417 = pneg %p150
      $region50: #{mlp_forward.1} parent=47 // pred_check_branch
        %419 = sbr.rel (%p417) target = $region52
      $region51: #{mlp_forward.1} parent=47 // pred_region
        %p420 = scmp.lt.s32.totalorder %s17, 1
        %s421 = scalar_select %p420, %s17, 1
        %s422 = smul.addr %s421, 8
        %s423 = scalar_lea.vmem %s5, %s422
      $region52: #{mlp_forward.1} parent=47 // pred_fallthru
        _
    $region48: #{mlp_forward.1} parent=5 // pred_fallthru
      _
  $region6: #{mlp_forward.1} parent=0 // loop_footer
    %s15 = sadd.s32 1, %s11
  $region7: #{mlp_forward.1} parent=0 // loop_footer_branch
    %10 = sbr.rel target = $region3
  $region8: #{mlp_forward.1} parent=0 // loop_exit
    _

</llo_original>
